<compile_context>
chip_gen: v7x
topology: tpu7x:2x2x1
jax: 0.10.0
libtpu: 0.0.40
codegen_flags: <defaults>
</compile_context>

<pallas_src>
import jax
import jax.numpy as jnp
from jax.experimental import pallas as pl
from jax.experimental.pallas import tpu as pltpu


def _round_up(x, m):
    return ((x + m - 1) // m) * m


def _vmem_caps():
    """(tile_budget_bytes, vmem_limit_bytes) derived from the running chip's VMEM capacity."""
    cap = 64 * 1024 * 1024  # conservative default (v7x-class)
    try:
        cap = int(getattr(pltpu.get_tpu_info(), "vmem_capacity_bytes", cap)) or cap
    except Exception:
        pass
    vmem_limit = min(int(cap * 0.8), 100 * 1024 * 1024)
    tile_budget = int(vmem_limit * 0.8)
    return tile_budget, vmem_limit


def _choose_tile_m(m, stream_bytes_per_row, resident_bytes, budget):
    """Largest M-tile (>=128, multiple of 128) whose double-buffered streams + residents fit."""
    cap = max(128, _round_up(m, 128))
    for tm in (2048, 1024, 512, 256, 128):
        if tm > cap:
            continue
        if resident_bytes + 2 * tm * stream_bytes_per_row <= budget:
            return tm
    return 128


# --------------------- kernel A: conv matmul + per-tile partial BN stats ---------------------

def _conv_stats_kernel(patches_ref, w_ref, conv_ref, stats_ref):
    # [TM, K_PAD] @ [K_PAD, COUT_PAD] -> f32 on the MXU.  Executed exactly once per tile.
    acc = jnp.dot(patches_ref[...], w_ref[...], preferred_element_type=jnp.float32)
    conv_ref[...] = acc.astype(conv_ref.dtype)
    # Per-tile per-channel partial {sum, sum_sq}; zero-padded rows/channels contribute nothing.
    stats_ref[0] = jnp.concatenate(
        [jnp.sum(acc, axis=0, keepdims=True),
         jnp.sum(acc * acc, axis=0, keepdims=True)], axis=0)


# --------------------- kernel B: normalize (folded affine) + ReLU ----------------------------

def _bn_relu_kernel(conv_ref, scale_ref, shift_ref, o_ref):
    x = conv_ref[...].astype(jnp.float32)
    o_ref[...] = jnp.maximum(x * scale_ref[...] + shift_ref[...], 0.0).astype(o_ref.dtype)


def conv_bn_relu(x_nchw, weight, bias, gamma, beta, *, stride=1, padding=0, eps=1e-5,
                 compute_dtype=jnp.bfloat16):
    """Fused Conv2d -> BatchNorm2d(batch stats) -> ReLU.

    x_nchw: [N, Cin, H, W], weight: [Cout, Cin, KH, KW] (PyTorch conventions).
    `bias` is accepted for API parity but cancels exactly under training-mode BatchNorm.
    """
    del bias  # cancels exactly under batch-stat BN (output-identical to the PyTorch forward)

    N, Cin, H, W = x_nchw.shape
    Cout, _, KH, KW = weight.shape

    # ---- glue: pad + im2col (bf16 cast folded in) -------------------------------------------
    if padding:
        x_nchw = jnp.pad(x_nchw, ((0, 0), (0, 0), (padding, padding), (padding, padding)))
        H, W = H + 2 * padding, W + 2 * padding
    OH = (H - KH) // stride + 1
    OW = (W - KW) // stride + 1

    x_nhwc = jnp.transpose(x_nchw, (0, 2, 3, 1)).astype(compute_dtype)   # [N, H, W, Cin]
    taps = [x_nhwc[:, kh:kh + stride * OH:stride, kw:kw + stride * OW:stride, :]
            for kh in range(KH) for kw in range(KW)]
    M = N * OH * OW
    K = KH * KW * Cin
    patches = jnp.concatenate(taps, axis=-1).reshape(M, K)   # K-order = (kh, kw, cin)

    # weight [Cout, Cin, KH, KW] -> [KH, KW, Cin, Cout] -> [K, Cout] matching (kh, kw, cin)
    w_mat = jnp.transpose(weight, (2, 3, 1, 0)).reshape(K, Cout).astype(compute_dtype)

    # ---- lane-dense padding of both matmul dims + generation-aware tiling -------------------
    COUT_PAD = _round_up(Cout, 128)
    K_PAD = _round_up(K, 128)
    in_sz = jnp.dtype(compute_dtype).itemsize

    tile_budget, vmem_limit = _vmem_caps()
    TM = _choose_tile_m(
        M,
        stream_bytes_per_row=K_PAD * in_sz + COUT_PAD * in_sz,          # patches + conv-out tiles
        resident_bytes=2 * K_PAD * COUT_PAD * in_sz + 8 * COUT_PAD * 4,  # weights (dbl-buf) + stats
        budget=tile_budget)
    M_PAD = _round_up(M, TM)
    MT = M_PAD // TM

    patches = jnp.pad(patches, ((0, M_PAD - M), (0, K_PAD - K)))
    w_mat = jnp.pad(w_mat, ((0, K_PAD - K), (0, COUT_PAD - Cout)))

    # ---- kernel A: conv + partial stats (grid "parallel": no cross-tile state) ---------------
    conv_flat, partial_stats = pl.pallas_call(
        _conv_stats_kernel,
        out_shape=(jax.ShapeDtypeStruct((M_PAD, COUT_PAD), compute_dtype),
                   jax.ShapeDtypeStruct((MT, 2, COUT_PAD), jnp.float32)),
        grid_spec=pltpu.PrefetchScalarGridSpec(
            num_scalar_prefetch=0,
            grid=(MT,),
            in_specs=[
                pl.BlockSpec((TM, K_PAD), lambda m: (m, 0)),          # streamed patch tiles
                pl.BlockSpec((K_PAD, COUT_PAD), lambda m: (0, 0)),    # resident weights
            ],
            out_specs=[
                pl.BlockSpec((TM, COUT_PAD), lambda m: (m, 0)),       # raw conv (bf16)
                pl.BlockSpec((1, 2, COUT_PAD), lambda m: (m, 0, 0)),  # per-tile partial stats
            ],
        ),
        compiler_params=pltpu.CompilerParams(
            dimension_semantics=("parallel",),
            vmem_limit_bytes=vmem_limit,
        ),
        cost_estimate=pl.CostEstimate(
            flops=2 * M_PAD * K_PAD * COUT_PAD,
            transcendentals=0,
            bytes_accessed=(M_PAD * K_PAD * in_sz + K_PAD * COUT_PAD * in_sz
                            + M_PAD * COUT_PAD * in_sz + MT * 2 * COUT_PAD * 4),
        ),
    )(patches, w_mat)

    # ---- tiny JAX epilogue: global batch stats + folded BN affine (hoisted out of hot loop) --
    stats = jnp.sum(partial_stats, axis=0)                    # [2, COUT_PAD]
    inv_m = jnp.float32(1.0 / M)
    mean = stats[0] * inv_m
    var = jnp.maximum(stats[1] * inv_m - mean * mean, 0.0)    # guard one-pass cancellation
    inv_std = jax.lax.rsqrt(var + eps)
    gamma_pad = jnp.pad(gamma.astype(jnp.float32), (0, COUT_PAD - Cout))
    beta_pad = jnp.pad(beta.astype(jnp.float32), (0, COUT_PAD - Cout))
    scale = inv_std * gamma_pad
    scale_row = scale.reshape(1, COUT_PAD)
    shift_row = (beta_pad - mean * scale).reshape(1, COUT_PAD)

    # ---- kernel B: streaming FMA + ReLU (VPU / memory-bound) ---------------------------------
    TMB = TM
    for cand in (2048, 1024, 512, 256):
        if (cand > TMB and M_PAD % cand == 0
                and 8 * COUT_PAD * 4 + 2 * cand * (COUT_PAD * in_sz + COUT_PAD * 4) <= tile_budget):
            TMB = cand
            break
    MTB = M_PAD // TMB

    out_flat = pl.pallas_call(
        _bn_relu_kernel,
        out_shape=jax.ShapeDtypeStruct((M_PAD, COUT_PAD), jnp.float32),
        grid_spec=pltpu.PrefetchScalarGridSpec(
            num_scalar_prefetch=0,
            grid=(MTB,),
            in_specs=[
                pl.BlockSpec((TMB, COUT_PAD), lambda m: (m, 0)),      # streamed conv tiles
                pl.BlockSpec((1, COUT_PAD), lambda m: (0, 0)),        # resident scale
                pl.BlockSpec((1, COUT_PAD), lambda m: (0, 0)),        # resident shift
            ],
            out_specs=pl.BlockSpec((TMB, COUT_PAD), lambda m: (m, 0)),
        ),
        compiler_params=pltpu.CompilerParams(
            dimension_semantics=("parallel",),
            vmem_limit_bytes=vmem_limit,
        ),
        cost_estimate=pl.CostEstimate(
            flops=2 * M_PAD * COUT_PAD,
            transcendentals=0,
            bytes_accessed=M_PAD * COUT_PAD * (in_sz + 4) + 2 * COUT_PAD * 4,
        ),
    )(conv_flat, scale_row, shift_row)

    # strip padding, back to NCHW (consumer expects PyTorch layout)
    out = out_flat[:M, :Cout].reshape(N, OH, OW, Cout)
    return jnp.transpose(out, (0, 3, 1, 2))


def _reference(x, weight, bias, gamma, beta, *, stride, padding, eps):
    """Pure-JAX f32 reference: Conv2d -> BatchNorm2d(batch stats) -> ReLU."""
    conv = jax.lax.conv_general_dilated(
        x, weight, window_strides=(stride, stride),
        padding=[(padding, padding), (padding, padding)],
        dimension_numbers=("NCHW", "OIHW", "NCHW"))
    conv = conv + bias.reshape(1, -1, 1, 1)
    mean = jnp.mean(conv, axis=(0, 2, 3), keepdims=True)
    var = jnp.mean((conv - mean) ** 2, axis=(0, 2, 3), keepdims=True)
    y = (conv - mean) * jax.lax.rsqrt(var + eps)
    y = y * gamma.reshape(1, -1, 1, 1) + beta.reshape(1, -1, 1, 1)
    return jnp.maximum(y, 0.0)


if __name__ == "__main__":
    # ConvBNRelu(in_planes=4, out_planes=8, kernel_size=3, stride=1, padding=0)
    N, Cin, H, W = 2, 4, 16, 16
    Cout, KH, KW = 8, 3, 3

    key = jax.random.PRNGKey(0)
    kx, kw, kb, kg, kbt = jax.random.split(key, 5)
    x = jax.random.normal(kx, (N, Cin, H, W), dtype=jnp.float32)
    weight = jax.random.normal(kw, (Cout, Cin, KH, KW), dtype=jnp.float32) * 0.1
    bias = jax.random.normal(kb, (Cout,), dtype=jnp.float32) * 0.1
    gamma = jnp.ones((Cout,), dtype=jnp.float32) + 0.05 * jax.random.normal(kg, (Cout,))
    beta = 0.05 * jax.random.normal(kbt, (Cout,), dtype=jnp.float32)

    y = conv_bn_relu(x, weight, bias, gamma, beta, stride=1, padding=0)
    y = jax.block_until_ready(y)
    assert y.shape == (N, Cout, H - KH + 1, W - KW + 1)

    # Loose tolerance: matmul + intermediate in bf16 (f32 accumulation); BN re-normalizes.
    y_ref = _reference(x, weight, bias, gamma, beta, stride=1, padding=0, eps=1e-5)
    err = float(jnp.max(jnp.abs(y - y_ref)))
    assert err < 1e-1, f"max abs err {err}"

    print("KERNEL_OK")
</pallas_src>

<mosaic_0001>
module attributes {stable_mosaic.version = 11 : i64} {
  func.func @_conv_stats_kernel(%arg0: i32, %arg1: memref<512x128xbf16, #tpu.memory_space<vmem>>, %arg2: memref<128x128xbf16, #tpu.memory_space<vmem>>, %arg3: memref<512x128xbf16, #tpu.memory_space<vmem>>, %arg4: memref<1x2x128xf32, #tpu.memory_space<vmem>>) attributes {dimension_semantics = [#tpu.dimension_semantics<parallel>], iteration_bounds = array<i64: 1>, scalar_prefetch = 0 : i64, scratch_operands = 0 : i64, tpu.core_type = #tpu.core_type<tc>, window_params = [{transform_indices = @transform_0, window_bounds = array<i64: 512, 128>}, {pipeline_mode = #tpu.pipeline_mode<synchronous>, transform_indices = @transform_1, window_bounds = array<i64: 128, 128>}, {transform_indices = @transform_2, window_bounds = array<i64: 512, 128>}, {transform_indices = @transform_3, window_bounds = array<i64: 1, 2, 128>}]} {
    %c0 = arith.constant 0 : index
    %c0_0 = arith.constant 0 : index
    %0 = vector.load %arg1[%c0, %c0_0] : memref<512x128xbf16, #tpu.memory_space<vmem>>, vector<512x128xbf16>
    %c0_1 = arith.constant 0 : index
    %c0_2 = arith.constant 0 : index
    %1 = vector.load %arg2[%c0_1, %c0_2] : memref<128x128xbf16, #tpu.memory_space<vmem>>, vector<128x128xbf16>
    %cst = arith.constant dense<0.000000e+00> : vector<512x128xf32>
    %2 = tpu.matmul %0, %1, %cst {dimension_numbers = #tpu.dot_dimension_numbers<[1], [0], [0], [1], [0, 0, 1, 1], [], []>} : vector<512x128xbf16>, vector<128x128xbf16>, vector<512x128xf32> -> vector<512x128xf32>
    %3 = arith.truncf %2 : vector<512x128xf32> to vector<512x128xbf16>
    %c0_3 = arith.constant 0 : index
    %c0_4 = arith.constant 0 : index
    %4 = vector.load %arg3[%c0_3, %c0_4] : memref<512x128xbf16, #tpu.memory_space<vmem>>, vector<512x128xbf16>
    tpu.vector_store %arg3[%c0_3, %c0_4], %3 {strides = array<i32>} : memref<512x128xbf16, #tpu.memory_space<vmem>>, vector<512x128xbf16>,
    %cst_5 = arith.constant dense<0.000000e+00> : vector<128xf32>
    %5 = vector.multi_reduction <add>, %2, %cst_5 [0] : vector<512x128xf32> to vector<128xf32>
    %6 = vector.shape_cast %5 : vector<128xf32> to vector<1x128xf32>
    %7 = arith.mulf %2, %2 : vector<512x128xf32>
    %cst_6 = arith.constant dense<0.000000e+00> : vector<128xf32>
    %8 = vector.multi_reduction <add>, %7, %cst_6 [0] : vector<512x128xf32> to vector<128xf32>
    %9 = vector.shape_cast %8 : vector<128xf32> to vector<1x128xf32>
    %10 = tpu.concatenate %6, %9 in 0 : vector<1x128xf32>, vector<1x128xf32> -> vector<2x128xf32>
    %c0_7 = arith.constant 0 : index
    %c0_8 = arith.constant 0 : index
    %c0_9 = arith.constant 0 : index
    %11 = vector.load %arg4[%c0_7, %c0_8, %c0_9] : memref<1x2x128xf32, #tpu.memory_space<vmem>>, vector<1x2x128xf32>
    %12 = vector.shape_cast %11 : vector<1x2x128xf32> to vector<2x128xf32>
    %13 = vector.shape_cast %10 : vector<2x128xf32> to vector<1x2x128xf32>
    tpu.vector_store %arg4[%c0_7, %c0_8, %c0_9], %13 {strides = array<i32>} : memref<1x2x128xf32, #tpu.memory_space<vmem>>, vector<1x2x128xf32>,
    return
  }
  func.func @transform_0(%arg0: i32) -> (i32, i32) {
    %c0_i32 = arith.constant 0 : i32
    %c0_i32_0 = arith.constant 0 : i32
    return %arg0, %c0_i32 : i32, i32
  }
  func.func @transform_1(%arg0: i32) -> (i32, i32) {
    %c0_i32 = arith.constant 0 : i32
    %c0_i32_0 = arith.constant 0 : i32
    %c0_i32_1 = arith.constant 0 : i32
    return %c0_i32, %c0_i32_0 : i32, i32
  }
  func.func @transform_2(%arg0: i32) -> (i32, i32) {
    %c0_i32 = arith.constant 0 : i32
    %c0_i32_0 = arith.constant 0 : i32
    return %arg0, %c0_i32 : i32, i32
  }
  func.func @transform_3(%arg0: i32) -> (i32, i32, i32) {
    %c0_i32 = arith.constant 0 : i32
    %c0_i32_0 = arith.constant 0 : i32
    %c0_i32_1 = arith.constant 0 : i32
    return %arg0, %c0_i32, %c0_i32_0 : i32, i32, i32
  }
}

</mosaic_0001>

<llo_original>
// kernel: tpu_custom_call.1
$region0: #{tpu_custom_call.1}
  #allocation0 [shape = 'u32[]', space=smem, size = 0x4, offset = 0x4, fixed_abs, tag = 'smem constant byte address 0x4 - core index']
  #allocation1 [shape = 'u32[144,128]{1,0:T(1,128)}', space=vmem, size = 0x12000, scoped, tag = 'internal scratch']
  %s0 = inlined_call_operand.hbm [shape: bf16[512,128], index: 0, kind: input, shape index: {}]
  %s1 = inlined_call_operand.hbm [shape: bf16[128,128], index: 1, kind: input, shape index: {}]
  %s2 = inlined_call_operand.hbm [shape: bf16[512,128], index: 2, kind: output, shape index: {0}]
  %s3 = inlined_call_operand.hbm [shape: f32[1,2,128], index: 3, kind: output, shape index: {1}]
  %4 = xla_tuple %s2, %s3
  %s5 = sld [smem:[#allocation0]]
  $region34: #{tpu_custom_call.1} parent=0
    _
  %s7 = ssub.s32 1, %s5
  %s8 = scalar_select 0, %s7, %s5
  $region1: #{tpu_custom_call.1} parent=0
    #allocation2 [shape = 'u8[131072]{0}', space=vmem, size = 0x20000, scoped, tag = 'input window, operand 0, single buffered']
    #allocation3 [shape = 's32[1]{0}', space=sflag, size = 0x4, scoped, tag = 'scoped memory for tpu_custom_call.1']
    #allocation4 [shape = 's32[1]{0}', space=sflag, size = 0x4, scoped, tag = 'scoped memory for tpu_custom_call.1']
    #allocation5 [shape = 'u8[32768]{0}', space=vmem, size = 0x8000, scoped, tag = 'input window, operand 1, single buffered']
    #allocation6 [shape = 's32[1]{0}', space=sflag, size = 0x4, scoped, tag = 'scoped memory for tpu_custom_call.1']
    #allocation7 [shape = 'u8[131072]{0}', space=vmem, size = 0x20000, scoped, tag = 'output window, operand 0, single buffered']
    #allocation8 [shape = 'u8[1024]{0}', space=vmem, size = 0x400, scoped, tag = 'output window, operand 1, single buffered']
    #allocation9 [shape = 's32[1]{0}', space=sflag, size = 0x4, scoped, tag = 'scoped memory for tpu_custom_call.1']
    %9 = vsyncpa [#allocation3], 0
    %10 = vsyncpa [#allocation6], 0
    %11 = vsyncpa [#allocation4], 0
    %12 = vsyncpa [#allocation9], 0
    // Predicated region
    $region2: #{tpu_custom_call.1} parent=1 // pred_check
      _
    $region3: #{tpu_custom_call.1} parent=1 // pred_check_branch
      %14 = sbr.rel (0) target = $region5
    $region4: #{tpu_custom_call.1} parent=1 // pred_region
      %s16 = ssub.s32 4096, 4096
      %17 = vsyncadd [#allocation3], %s16
      %s18 = sshll.u32 [#allocation2], 4
      %s19 = int_to_ptr.vmem [resolvable:$true] %s18
      %24 = dma.hbm_to_vmem [thread:$0]  %s0, 4096, %s19, [#allocation3], 64, 64, 4
    $region5: #{tpu_custom_call.1} parent=1 // pred_fallthru
      _
    // Predicated region
    $region6: #{tpu_custom_call.1} parent=1 // pred_check
      _
    $region7: #{tpu_custom_call.1} parent=1 // pred_check_branch
      %26 = sbr.rel (0) target = $region9
    $region8: #{tpu_custom_call.1} parent=1 // pred_region
      %s28 = ssub.s32 1024, 1024
      %29 = vsyncadd [#allocation6], %s28
      %s30 = sshll.u32 [#allocation5], 4
      %s31 = int_to_ptr.vmem [resolvable:$true] %s30
      %36 = dma.hbm_to_vmem [thread:$0]  %s1, 1024, %s31, [#allocation6], 64, 64, 4
    $region9: #{tpu_custom_call.1} parent=1 // pred_fallthru
      _
    // Predicated region
    $region10: #{tpu_custom_call.1} parent=1 // pred_check
      _
    $region11: #{tpu_custom_call.1} parent=1 // pred_check_branch
      %38 = sbr.rel (0) target = $region13
    $region12: #{tpu_custom_call.1} parent=1 // pred_region
      %39 = dma.done [#allocation3], 4096
    $region13: #{tpu_custom_call.1} parent=1 // pred_fallthru
      _
    // Predicated region
    $region14: #{tpu_custom_call.1} parent=1 // pred_check
      _
    $region15: #{tpu_custom_call.1} parent=1 // pred_check_branch
      %41 = sbr.rel (0) target = $region17
    $region16: #{tpu_custom_call.1} parent=1 // pred_region
      %42 = dma.done [#allocation6], 1024
    $region17: #{tpu_custom_call.1} parent=1 // pred_fallthru
      _
    %v44 = vld [vmem:[#allocation2] sm:$0xf]
    %v45 = vld [vmem:[#allocation2 + $0x4] sm:$0xf]
    %v46 = vld [vmem:[#allocation2 + $0x8] sm:$0xf]
    %v47 = vld [vmem:[#allocation2 + $0xc] sm:$0xf]
    %v48 = vld [vmem:[#allocation2 + $0x10] sm:$0xf]
    %v49 = vld [vmem:[#allocation2 + $0x14] sm:$0xf]
    %v50 = vld [vmem:[#allocation2 + $0x18] sm:$0xf]
    %v51 = vld [vmem:[#allocation2 + $0x1c] sm:$0xf]
    %v52 = vld [vmem:[#allocation2 + $0x20] sm:$0xf]
    %v53 = vld [vmem:[#allocation2 + $0x24] sm:$0xf]
    %v54 = vld [vmem:[#allocation2 + $0x28] sm:$0xf]
    %v55 = vld [vmem:[#allocation2 + $0x2c] sm:$0xf]
    %v56 = vld [vmem:[#allocation2 + $0x30] sm:$0xf]
    %v57 = vld [vmem:[#allocation2 + $0x34] sm:$0xf]
    %v58 = vld [vmem:[#allocation2 + $0x38] sm:$0xf]
    %v59 = vld [vmem:[#allocation2 + $0x3c] sm:$0xf]
    %v60 = vld [vmem:[#allocation2 + $0x40] sm:$0xf]
    %v61 = vld [vmem:[#allocation2 + $0x44] sm:$0xf]
    %v62 = vld [vmem:[#allocation2 + $0x48] sm:$0xf]
    %v63 = vld [vmem:[#allocation2 + $0x4c] sm:$0xf]
    %v64 = vld [vmem:[#allocation2 + $0x50] sm:$0xf]
    %v65 = vld [vmem:[#allocation2 + $0x54] sm:$0xf]
    %v66 = vld [vmem:[#allocation2 + $0x58] sm:$0xf]
    %v67 = vld [vmem:[#allocation2 + $0x5c] sm:$0xf]
    %v68 = vld [vmem:[#allocation2 + $0x60] sm:$0xf]
    %v69 = vld [vmem:[#allocation2 + $0x64] sm:$0xf]
    %v70 = vld [vmem:[#allocation2 + $0x68] sm:$0xf]
    %v71 = vld [vmem:[#allocation2 + $0x6c] sm:$0xf]
    %v72 = vld [vmem:[#allocation2 + $0x70] sm:$0xf]
    %v73 = vld [vmem:[#allocation2 + $0x74] sm:$0xf]
    %v74 = vld [vmem:[#allocation2 + $0x78] sm:$0xf]
    %v75 = vld [vmem:[#allocation2 + $0x7c] sm:$0xf]
    %v76 = vld [vmem:[#allocation2 + $0x80] sm:$0xf]
    %v77 = vld [vmem:[#allocation2 + $0x84] sm:$0xf]
    %v78 = vld [vmem:[#allocation2 + $0x88] sm:$0xf]
    %v79 = vld [vmem:[#allocation2 + $0x8c] sm:$0xf]
    %v80 = vld [vmem:[#allocation2 + $0x90] sm:$0xf]
    %v81 = vld [vmem:[#allocation2 + $0x94] sm:$0xf]
    %v82 = vld [vmem:[#allocation2 + $0x98] sm:$0xf]
    %v83 = vld [vmem:[#allocation2 + $0x9c] sm:$0xf]
    %v84 = vld [vmem:[#allocation2 + $0xa0] sm:$0xf]
    %v85 = vld [vmem:[#allocation2 + $0xa4] sm:$0xf]
    %v86 = vld [vmem:[#allocation2 + $0xa8] sm:$0xf]
    %v87 = vld [vmem:[#allocation2 + $0xac] sm:$0xf]
    %v88 = vld [vmem:[#allocation2 + $0xb0] sm:$0xf]
    %v89 = vld [vmem:[#allocation2 + $0xb4] sm:$0xf]
    %v90 = vld [vmem:[#allocation2 + $0xb8] sm:$0xf]
    %v91 = vld [vmem:[#allocation2 + $0xbc] sm:$0xf]
    %v92 = vld [vmem:[#allocation2 + $0xc0] sm:$0xf]
    %v93 = vld [vmem:[#allocation2 + $0xc4] sm:$0xf]
    %v94 = vld [vmem:[#allocation2 + $0xc8] sm:$0xf]
    %v95 = vld [vmem:[#allocation2 + $0xcc] sm:$0xf]
    %v96 = vld [vmem:[#allocation2 + $0xd0] sm:$0xf]
    %v97 = vld [vmem:[#allocation2 + $0xd4] sm:$0xf]
    %v98 = vld [vmem:[#allocation2 + $0xd8] sm:$0xf]
    %v99 = vld [vmem:[#allocation2 + $0xdc] sm:$0xf]
    %v100 = vld [vmem:[#allocation2 + $0xe0] sm:$0xf]
    %v101 = vld [vmem:[#allocation2 + $0xe4] sm:$0xf]
    %v102 = vld [vmem:[#allocation2 + $0xe8] sm:$0xf]
    %v103 = vld [vmem:[#allocation2 + $0xec] sm:$0xf]
    %v104 = vld [vmem:[#allocation2 + $0xf0] sm:$0xf]
    %v105 = vld [vmem:[#allocation2 + $0xf4] sm:$0xf]
    %v106 = vld [vmem:[#allocation2 + $0xf8] sm:$0xf]
    %v107 = vld [vmem:[#allocation2 + $0xfc] sm:$0xf]
    %v108 = vld [vmem:[#allocation5] sm:$0xf]
    %v109 = vld [vmem:[#allocation5 + $0x4] sm:$0xf]
    %v110 = vld [vmem:[#allocation5 + $0x8] sm:$0xf]
    %v111 = vld [vmem:[#allocation5 + $0xc] sm:$0xf]
    %v112 = vld [vmem:[#allocation5 + $0x10] sm:$0xf]
    %v113 = vld [vmem:[#allocation5 + $0x14] sm:$0xf]
    %v114 = vld [vmem:[#allocation5 + $0x18] sm:$0xf]
    %v115 = vld [vmem:[#allocation5 + $0x1c] sm:$0xf]
    %v116 = vld [vmem:[#allocation5 + $0x20] sm:$0xf]
    %v117 = vld [vmem:[#allocation5 + $0x24] sm:$0xf]
    %v118 = vld [vmem:[#allocation5 + $0x28] sm:$0xf]
    %v119 = vld [vmem:[#allocation5 + $0x2c] sm:$0xf]
    %v120 = vld [vmem:[#allocation5 + $0x30] sm:$0xf]
    %v121 = vld [vmem:[#allocation5 + $0x34] sm:$0xf]
    %v122 = vld [vmem:[#allocation5 + $0x38] sm:$0xf]
    %v123 = vld [vmem:[#allocation5 + $0x3c] sm:$0xf]
    %v188 = vunpack.c.l.b16 %v44
    %v189 = vunpack.c.l.b16 %v45
    %v190 = vunpack.c.l.b16 %v46
    %v191 = vunpack.c.l.b16 %v47
    %v192 = vunpack.c.l.b16 %v48
    %v193 = vunpack.c.l.b16 %v49
    %v194 = vunpack.c.l.b16 %v50
    %v195 = vunpack.c.l.b16 %v51
    %v196 = vunpack.c.l.b16 %v52
    %v197 = vunpack.c.l.b16 %v53
    %v198 = vunpack.c.l.b16 %v54
    %v199 = vunpack.c.l.b16 %v55
    %v200 = vunpack.c.l.b16 %v56
    %v201 = vunpack.c.l.b16 %v57
    %v202 = vunpack.c.l.b16 %v58
    %v203 = vunpack.c.l.b16 %v59
    %v204 = vunpack.c.l.b16 %v60
    %v205 = vunpack.c.l.b16 %v61
    %v206 = vunpack.c.l.b16 %v62
    %v207 = vunpack.c.l.b16 %v63
    %v208 = vunpack.c.l.b16 %v64
    %v209 = vunpack.c.l.b16 %v65
    %v210 = vunpack.c.l.b16 %v66
    %v211 = vunpack.c.l.b16 %v67
    %v212 = vunpack.c.l.b16 %v68
    %v213 = vunpack.c.l.b16 %v69
    %v214 = vunpack.c.l.b16 %v70
    %v215 = vunpack.c.l.b16 %v71
    %v216 = vunpack.c.l.b16 %v72
    %v217 = vunpack.c.l.b16 %v73
    %v218 = vunpack.c.l.b16 %v74
    %v219 = vunpack.c.l.b16 %v75
    %v220 = vunpack.c.l.b16 %v76
    %v221 = vunpack.c.l.b16 %v77
    %v222 = vunpack.c.l.b16 %v78
    %v223 = vunpack.c.l.b16 %v79
    %v224 = vunpack.c.l.b16 %v80
    %v225 = vunpack.c.l.b16 %v81
    %v226 = vunpack.c.l.b16 %v82
    %v227 = vunpack.c.l.b16 %v83
    %v228 = vunpack.c.l.b16 %v84
    %v229 = vunpack.c.l.b16 %v85
    %v230 = vunpack.c.l.b16 %v86
    %v231 = vunpack.c.l.b16 %v87
    %v232 = vunpack.c.l.b16 %v88
    %v233 = vunpack.c.l.b16 %v89
    %v234 = vunpack.c.l.b16 %v90
    %v235 = vunpack.c.l.b16 %v91
    %v236 = vunpack.c.l.b16 %v92
    %v237 = vunpack.c.l.b16 %v93
    %v238 = vunpack.c.l.b16 %v94
    %v239 = vunpack.c.l.b16 %v95
    %v240 = vunpack.c.l.b16 %v96
    %v241 = vunpack.c.l.b16 %v97
    %v242 = vunpack.c.l.b16 %v98
    %v243 = vunpack.c.l.b16 %v99
    %v244 = vunpack.c.l.b16 %v100
    %v245 = vunpack.c.l.b16 %v101
    %v246 = vunpack.c.l.b16 %v102
    %v247 = vunpack.c.l.b16 %v103
    %v248 = vunpack.c.l.b16 %v104
    %v249 = vunpack.c.l.b16 %v105
    %v250 = vunpack.c.l.b16 %v106
    %v251 = vunpack.c.l.b16 %v107
    %v252 = vpack.c.b16 %v189, %v188
    %v253 = vpack.c.b16 %v191, %v190
    %v254 = vpack.c.b16 %v193, %v192
    %v255 = vpack.c.b16 %v195, %v194
    %v256 = vpack.c.b16 %v197, %v196
    %v257 = vpack.c.b16 %v199, %v198
    %v258 = vpack.c.b16 %v201, %v200
    %v259 = vpack.c.b16 %v203, %v202
    %v260 = vpack.c.b16 %v205, %v204
    %v261 = vpack.c.b16 %v207, %v206
    %v262 = vpack.c.b16 %v209, %v208
    %v263 = vpack.c.b16 %v211, %v210
    %v264 = vpack.c.b16 %v213, %v212
    %v265 = vpack.c.b16 %v215, %v214
    %v266 = vpack.c.b16 %v217, %v216
    %v267 = vpack.c.b16 %v219, %v218
    %v268 = vpack.c.b16 %v221, %v220
    %v269 = vpack.c.b16 %v223, %v222
    %v270 = vpack.c.b16 %v225, %v224
    %v271 = vpack.c.b16 %v227, %v226
    %v272 = vpack.c.b16 %v229, %v228
    %v273 = vpack.c.b16 %v231, %v230
    %v274 = vpack.c.b16 %v233, %v232
    %v275 = vpack.c.b16 %v235, %v234
    %v276 = vpack.c.b16 %v237, %v236
    %v277 = vpack.c.b16 %v239, %v238
    %v278 = vpack.c.b16 %v241, %v240
    %v279 = vpack.c.b16 %v243, %v242
    %v280 = vpack.c.b16 %v245, %v244
    %v281 = vpack.c.b16 %v247, %v246
    %v282 = vpack.c.b16 %v249, %v248
    %v283 = vpack.c.b16 %v251, %v250
    %v332 = vunpack.c.l.b16 %v108
    %v333 = vunpack.c.l.b16 %v109
    %v334 = vunpack.c.l.b16 %v110
    %v335 = vunpack.c.l.b16 %v111
    %v336 = vunpack.c.l.b16 %v112
    %v337 = vunpack.c.l.b16 %v113
    %v338 = vunpack.c.l.b16 %v114
    %v339 = vunpack.c.l.b16 %v115
    %v340 = vunpack.c.l.b16 %v116
    %v341 = vunpack.c.l.b16 %v117
    %v342 = vunpack.c.l.b16 %v118
    %v343 = vunpack.c.l.b16 %v119
    %v344 = vunpack.c.l.b16 %v120
    %v345 = vunpack.c.l.b16 %v121
    %v346 = vunpack.c.l.b16 %v122
    %v347 = vunpack.c.l.b16 %v123
    %v348 = vpack.c.b16 %v333, %v332
    %v349 = vpack.c.b16 %v335, %v334
    %v350 = vpack.c.b16 %v337, %v336
    %v351 = vpack.c.b16 %v339, %v338
    %v352 = vpack.c.b16 %v341, %v340
    %v353 = vpack.c.b16 %v343, %v342
    %v354 = vpack.c.b16 %v345, %v344
    %v355 = vpack.c.b16 %v347, %v346
    %364 = vmatprep.subr.bf16.mxu0 0
    %365 = vmatpush1.bf16.msra.mxu0 %v348
    %366 = vmatprep.subr.bf16.mxu0 0
    %367 = vmatpush1.bf16.msra.mxu0 %v349
    %368 = vmatprep.subr.bf16.mxu0 0
    %369 = vmatpush1.bf16.msra.mxu0 %v350
    %370 = vmatprep.subr.bf16.mxu0 0
    %371 = vmatpush1.bf16.msra.mxu0 %v351
    %372 = vmatprep.subr.bf16.mxu0 0
    %373 = vmatpush1.bf16.msra.mxu0 %v352
    %374 = vmatprep.subr.bf16.mxu0 0
    %375 = vmatpush1.bf16.msra.mxu0 %v353
    %376 = vmatprep.subr.bf16.mxu0 0
    %377 = vmatpush1.bf16.msra.mxu0 %v354
    %378 = vmatprep.subr.bf16.mxu0 0
    %379 = vmatpush1.bf16.msra.mxu0 %v355
    %380 = vmatprep.subr.bf16.mxu0 0
    %381 = vmatpush1.bf16.msra.mxu0 0
    %382 = vmatprep.subr.bf16.mxu0 0
    %383 = vmatpush1.bf16.msra.mxu0 0
    %384 = vmatprep.subr.bf16.mxu0 0
    %385 = vmatpush1.bf16.msra.mxu0 0
    %386 = vmatprep.subr.bf16.mxu0 0
    %387 = vmatpush1.bf16.msra.mxu0 0
    %388 = vmatprep.subr.bf16.mxu0 0
    %389 = vmatpush1.bf16.msra.mxu0 0
    %390 = vmatprep.subr.bf16.mxu0 0
    %391 = vmatpush1.bf16.msra.mxu0 0
    %392 = vmatprep.subr.bf16.mxu0 0
    %393 = vmatpush1.bf16.msra.mxu0 0
    %394 = vmatprep.subr.bf16.mxu0 0
    %395 = vmatpush1.bf16.msra.mxu0 0
    %396 = vmatprep.mubr.bf16.mxu0 0
    %397 = vmatmul.mubr.bf16.gmra.mrb[0].mxu0 %v252
    %v398 = vpop.f32.mrb[0].mxu0
    %v399 = vadd.f32 0.0, %v398
    %v400 = vpop.f32.mrb[0].mxu0
    %v401 = vpop.f32.mrb[0].mxu0
    %v402 = vadd.f32 0.0, %v401
    %v403 = vpop.f32.mrb[0].mxu0
    %404 = vmatprep.mubr.bf16.mxu0 0
    %405 = vmatmul.mubr.bf16.gmra.mrb[0].mxu0 %v253
    %v406 = vpop.f32.mrb[0].mxu0
    %v407 = vadd.f32 0.0, %v406
    %v408 = vpop.f32.mrb[0].mxu0
    %v409 = vpop.f32.mrb[0].mxu0
    %v410 = vadd.f32 0.0, %v409
    %v411 = vpop.f32.mrb[0].mxu0
    %412 = vmatprep.mubr.bf16.mxu0 0
    %413 = vmatmul.mubr.bf16.gmra.mrb[0].mxu0 %v254
    %v414 = vpop.f32.mrb[0].mxu0
    %v415 = vadd.f32 0.0, %v414
    %v416 = vpop.f32.mrb[0].mxu0
    %v417 = vpop.f32.mrb[0].mxu0
    %v418 = vadd.f32 0.0, %v417
    %v419 = vpop.f32.mrb[0].mxu0
    %420 = vmatprep.mubr.bf16.mxu0 0
    %421 = vmatmul.mubr.bf16.gmra.mrb[0].mxu0 %v255
    %v422 = vpop.f32.mrb[0].mxu0
    %v423 = vadd.f32 0.0, %v422
    %v424 = vpop.f32.mrb[0].mxu0
    %v425 = vpop.f32.mrb[0].mxu0
    %v426 = vadd.f32 0.0, %v425
    %v427 = vpop.f32.mrb[0].mxu0
    %428 = vmatprep.mubr.bf16.mxu0 0
    %429 = vmatmul.mubr.bf16.gmra.mrb[0].mxu0 %v256
    %v430 = vpop.f32.mrb[0].mxu0
    %v431 = vadd.f32 0.0, %v430
    %v432 = vpop.f32.mrb[0].mxu0
    %v433 = vpop.f32.mrb[0].mxu0
    %v434 = vadd.f32 0.0, %v433
    %v435 = vpop.f32.mrb[0].mxu0
    %436 = vmatprep.mubr.bf16.mxu0 0
    %437 = vmatmul.mubr.bf16.gmra.mrb[0].mxu0 %v257
    %v438 = vpop.f32.mrb[0].mxu0
    %v439 = vadd.f32 0.0, %v438
    %v440 = vpop.f32.mrb[0].mxu0
    %v441 = vpop.f32.mrb[0].mxu0
    %v442 = vadd.f32 0.0, %v441
    %v443 = vpop.f32.mrb[0].mxu0
    %444 = vmatprep.mubr.bf16.mxu0 0
    %445 = vmatmul.mubr.bf16.gmra.mrb[0].mxu0 %v258
    %v446 = vpop.f32.mrb[0].mxu0
    %v447 = vadd.f32 0.0, %v446
    %v448 = vpop.f32.mrb[0].mxu0
    %v449 = vpop.f32.mrb[0].mxu0
    %v450 = vadd.f32 0.0, %v449
    %v451 = vpop.f32.mrb[0].mxu0
    %452 = vmatprep.mubr.bf16.mxu0 0
    %453 = vmatmul.mubr.bf16.gmra.mrb[0].mxu0 %v259
    %v454 = vpop.f32.mrb[0].mxu0
    %v455 = vadd.f32 0.0, %v454
    %v456 = vpop.f32.mrb[0].mxu0
    %v457 = vpop.f32.mrb[0].mxu0
    %v458 = vadd.f32 0.0, %v457
    %v459 = vpop.f32.mrb[0].mxu0
    %460 = vmatprep.mubr.bf16.mxu0 0
    %461 = vmatmul.mubr.bf16.gmra.mrb[0].mxu0 %v260
    %v462 = vpop.f32.mrb[0].mxu0
    %v463 = vadd.f32 0.0, %v462
    %v464 = vpop.f32.mrb[0].mxu0
    %v465 = vpop.f32.mrb[0].mxu0
    %v466 = vadd.f32 0.0, %v465
    %v467 = vpop.f32.mrb[0].mxu0
    %468 = vmatprep.mubr.bf16.mxu0 0
    %469 = vmatmul.mubr.bf16.gmra.mrb[0].mxu0 %v261
    %v470 = vpop.f32.mrb[0].mxu0
    %v471 = vadd.f32 0.0, %v470
    %v472 = vpop.f32.mrb[0].mxu0
    %v473 = vpop.f32.mrb[0].mxu0
    %v474 = vadd.f32 0.0, %v473
    %v475 = vpop.f32.mrb[0].mxu0
    %476 = vmatprep.mubr.bf16.mxu0 0
    %477 = vmatmul.mubr.bf16.gmra.mrb[0].mxu0 %v262
    %v478 = vpop.f32.mrb[0].mxu0
    %v479 = vadd.f32 0.0, %v478
    %v480 = vpop.f32.mrb[0].mxu0
    %v481 = vpop.f32.mrb[0].mxu0
    %v482 = vadd.f32 0.0, %v481
    %v483 = vpop.f32.mrb[0].mxu0
    %484 = vmatprep.mubr.bf16.mxu0 0
    %485 = vmatmul.mubr.bf16.gmra.mrb[0].mxu0 %v263
    %v486 = vpop.f32.mrb[0].mxu0
    %v487 = vadd.f32 0.0, %v486
    %v488 = vpop.f32.mrb[0].mxu0
    %v489 = vpop.f32.mrb[0].mxu0
    %v490 = vadd.f32 0.0, %v489
    %v491 = vpop.f32.mrb[0].mxu0
    %492 = vmatprep.mubr.bf16.mxu0 0
    %493 = vmatmul.mubr.bf16.gmra.mrb[0].mxu0 %v264
    %v494 = vpop.f32.mrb[0].mxu0
    %v495 = vadd.f32 0.0, %v494
    %v496 = vpop.f32.mrb[0].mxu0
    %v497 = vpop.f32.mrb[0].mxu0
    %v498 = vadd.f32 0.0, %v497
    %v499 = vpop.f32.mrb[0].mxu0
    %500 = vmatprep.mubr.bf16.mxu0 0
    %501 = vmatmul.mubr.bf16.gmra.mrb[0].mxu0 %v265
    %v502 = vpop.f32.mrb[0].mxu0
    %v503 = vadd.f32 0.0, %v502
    %v504 = vpop.f32.mrb[0].mxu0
    %v505 = vpop.f32.mrb[0].mxu0
    %v506 = vadd.f32 0.0, %v505
    %v507 = vpop.f32.mrb[0].mxu0
    %508 = vmatprep.mubr.bf16.mxu0 0
    %509 = vmatmul.mubr.bf16.gmra.mrb[0].mxu0 %v266
    %v510 = vpop.f32.mrb[0].mxu0
    %v511 = vadd.f32 0.0, %v510
    %v512 = vpop.f32.mrb[0].mxu0
    %v513 = vpop.f32.mrb[0].mxu0
    %v514 = vadd.f32 0.0, %v513
    %v515 = vpop.f32.mrb[0].mxu0
    %516 = vmatprep.mubr.bf16.mxu0 0
    %517 = vmatmul.mubr.bf16.gmra.mrb[0].mxu0 %v267
    %v518 = vpop.f32.mrb[0].mxu0
    %v519 = vadd.f32 0.0, %v518
    %v520 = vpop.f32.mrb[0].mxu0
    %v521 = vpop.f32.mrb[0].mxu0
    %v522 = vadd.f32 0.0, %v521
    %v523 = vpop.f32.mrb[0].mxu0
    %524 = vmatprep.mubr.bf16.mxu0 0
    %525 = vmatmul.mubr.bf16.gmra.mrb[0].mxu0 %v268
    %v526 = vpop.f32.mrb[0].mxu0
    %v527 = vadd.f32 0.0, %v526
    %v528 = vpop.f32.mrb[0].mxu0
    %v529 = vpop.f32.mrb[0].mxu0
    %v530 = vadd.f32 0.0, %v529
    %v531 = vpop.f32.mrb[0].mxu0
    %532 = vmatprep.mubr.bf16.mxu0 0
    %533 = vmatmul.mubr.bf16.gmra.mrb[0].mxu0 %v269
    %v534 = vpop.f32.mrb[0].mxu0
    %v535 = vadd.f32 0.0, %v534
    %v536 = vpop.f32.mrb[0].mxu0
    %v537 = vpop.f32.mrb[0].mxu0
    %v538 = vadd.f32 0.0, %v537
    %v539 = vpop.f32.mrb[0].mxu0
    %540 = vmatprep.mubr.bf16.mxu0 0
    %541 = vmatmul.mubr.bf16.gmra.mrb[0].mxu0 %v270
    %v542 = vpop.f32.mrb[0].mxu0
    %v543 = vadd.f32 0.0, %v542
    %v544 = vpop.f32.mrb[0].mxu0
    %v545 = vpop.f32.mrb[0].mxu0
    %v546 = vadd.f32 0.0, %v545
    %v547 = vpop.f32.mrb[0].mxu0
    %548 = vmatprep.mubr.bf16.mxu0 0
    %549 = vmatmul.mubr.bf16.gmra.mrb[0].mxu0 %v271
    %v550 = vpop.f32.mrb[0].mxu0
    %v551 = vadd.f32 0.0, %v550
    %v552 = vpop.f32.mrb[0].mxu0
    %v553 = vpop.f32.mrb[0].mxu0
    %v554 = vadd.f32 0.0, %v553
    %v555 = vpop.f32.mrb[0].mxu0
    %556 = vmatprep.mubr.bf16.mxu0 0
    %557 = vmatmul.mubr.bf16.gmra.mrb[0].mxu0 %v272
    %v558 = vpop.f32.mrb[0].mxu0
    %v559 = vadd.f32 0.0, %v558
    %v560 = vpop.f32.mrb[0].mxu0
    %v561 = vpop.f32.mrb[0].mxu0
    %v562 = vadd.f32 0.0, %v561
    %v563 = vpop.f32.mrb[0].mxu0
    %564 = vmatprep.mubr.bf16.mxu0 0
    %565 = vmatmul.mubr.bf16.gmra.mrb[0].mxu0 %v273
    %v566 = vpop.f32.mrb[0].mxu0
    %v567 = vadd.f32 0.0, %v566
    %v568 = vpop.f32.mrb[0].mxu0
    %v569 = vpop.f32.mrb[0].mxu0
    %v570 = vadd.f32 0.0, %v569
    %v571 = vpop.f32.mrb[0].mxu0
    %572 = vmatprep.mubr.bf16.mxu0 0
    %573 = vmatmul.mubr.bf16.gmra.mrb[0].mxu0 %v274
    %v574 = vpop.f32.mrb[0].mxu0
    %v575 = vadd.f32 0.0, %v574
    %v576 = vpop.f32.mrb[0].mxu0
    %v577 = vpop.f32.mrb[0].mxu0
    %v578 = vadd.f32 0.0, %v577
    %v579 = vpop.f32.mrb[0].mxu0
    %580 = vmatprep.mubr.bf16.mxu0 0
    %581 = vmatmul.mubr.bf16.gmra.mrb[0].mxu0 %v275
    %v582 = vpop.f32.mrb[0].mxu0
    %v583 = vadd.f32 0.0, %v582
    %v584 = vpop.f32.mrb[0].mxu0
    %v585 = vpop.f32.mrb[0].mxu0
    %v586 = vadd.f32 0.0, %v585
    %v587 = vpop.f32.mrb[0].mxu0
    %588 = vmatprep.mubr.bf16.mxu0 0
    %589 = vmatmul.mubr.bf16.gmra.mrb[0].mxu0 %v276
    %v590 = vpop.f32.mrb[0].mxu0
    %v591 = vadd.f32 0.0, %v590
    %v592 = vpop.f32.mrb[0].mxu0
    %v593 = vpop.f32.mrb[0].mxu0
    %v594 = vadd.f32 0.0, %v593
    %v595 = vpop.f32.mrb[0].mxu0
    %596 = vmatprep.mubr.bf16.mxu0 0
    %597 = vmatmul.mubr.bf16.gmra.mrb[0].mxu0 %v277
    %v598 = vpop.f32.mrb[0].mxu0
    %v599 = vadd.f32 0.0, %v598
    %v600 = vpop.f32.mrb[0].mxu0
    %v601 = vpop.f32.mrb[0].mxu0
    %v602 = vadd.f32 0.0, %v601
    %v603 = vpop.f32.mrb[0].mxu0
    %604 = vmatprep.mubr.bf16.mxu0 0
    %605 = vmatmul.mubr.bf16.gmra.mrb[0].mxu0 %v278
    %v606 = vpop.f32.mrb[0].mxu0
    %v607 = vadd.f32 0.0, %v606
    %v608 = vpop.f32.mrb[0].mxu0
    %v609 = vpop.f32.mrb[0].mxu0
    %v610 = vadd.f32 0.0, %v609
    %v611 = vpop.f32.mrb[0].mxu0
    %612 = vmatprep.mubr.bf16.mxu0 0
    %613 = vmatmul.mubr.bf16.gmra.mrb[0].mxu0 %v279
    %v614 = vpop.f32.mrb[0].mxu0
    %v615 = vadd.f32 0.0, %v614
    %v616 = vpop.f32.mrb[0].mxu0
    %v617 = vpop.f32.mrb[0].mxu0
    %v618 = vadd.f32 0.0, %v617
    %v619 = vpop.f32.mrb[0].mxu0
    %620 = vmatprep.mubr.bf16.mxu0 0
    %621 = vmatmul.mubr.bf16.gmra.mrb[0].mxu0 %v280
    %v622 = vpop.f32.mrb[0].mxu0
    %v623 = vadd.f32 0.0, %v622
    %v624 = vpop.f32.mrb[0].mxu0
    %v625 = vpop.f32.mrb[0].mxu0
    %v626 = vadd.f32 0.0, %v625
    %v627 = vpop.f32.mrb[0].mxu0
    %628 = vmatprep.mubr.bf16.mxu0 0
    %629 = vmatmul.mubr.bf16.gmra.mrb[0].mxu0 %v281
    %v630 = vpop.f32.mrb[0].mxu0
    %v631 = vadd.f32 0.0, %v630
    %v632 = vpop.f32.mrb[0].mxu0
    %v633 = vpop.f32.mrb[0].mxu0
    %v634 = vadd.f32 0.0, %v633
    %v635 = vpop.f32.mrb[0].mxu0
    %636 = vmatprep.mubr.bf16.mxu0 0
    %637 = vmatmul.mubr.bf16.gmra.mrb[0].mxu0 %v282
    %v638 = vpop.f32.mrb[0].mxu0
    %v639 = vadd.f32 0.0, %v638
    %v640 = vpop.f32.mrb[0].mxu0
    %v641 = vpop.f32.mrb[0].mxu0
    %v642 = vadd.f32 0.0, %v641
    %v643 = vpop.f32.mrb[0].mxu0
    %644 = vmatprep.mubr.bf16.mxu0 0
    %645 = vmatmul.mubr.bf16.gmra.mrb[0].mxu0 %v283
    %v646 = vpop.f32.mrb[0].mxu0
    %v647 = vadd.f32 0.0, %v646
    %v648 = vpop.f32.mrb[0].mxu0
    %v649 = vpop.f32.mrb[0].mxu0
    %v650 = vadd.f32 0.0, %v649
    %v651 = vpop.f32.mrb[0].mxu0
    %652 = vdwg.mxu0
    %v653 = vpack.c.bf16 %v402, %v399
    %v654 = vpack.c.bf16 %v410, %v407
    %v655 = vpack.c.bf16 %v418, %v415
    %v656 = vpack.c.bf16 %v426, %v423
    %v657 = vpack.c.bf16 %v434, %v431
    %v658 = vpack.c.bf16 %v442, %v439
    %v659 = vpack.c.bf16 %v450, %v447
    %v660 = vpack.c.bf16 %v458, %v455
    %v661 = vpack.c.bf16 %v466, %v463
    %v662 = vpack.c.bf16 %v474, %v471
    %v663 = vpack.c.bf16 %v482, %v479
    %v664 = vpack.c.bf16 %v490, %v487
    %v665 = vpack.c.bf16 %v498, %v495
    %v666 = vpack.c.bf16 %v506, %v503
    %v667 = vpack.c.bf16 %v514, %v511
    %v668 = vpack.c.bf16 %v522, %v519
    %v669 = vpack.c.bf16 %v530, %v527
    %v670 = vpack.c.bf16 %v538, %v535
    %v671 = vpack.c.bf16 %v546, %v543
    %v672 = vpack.c.bf16 %v554, %v551
    %v673 = vpack.c.bf16 %v562, %v559
    %v674 = vpack.c.bf16 %v570, %v567
    %v675 = vpack.c.bf16 %v578, %v575
    %v676 = vpack.c.bf16 %v586, %v583
    %v677 = vpack.c.bf16 %v594, %v591
    %v678 = vpack.c.bf16 %v602, %v599
    %v679 = vpack.c.bf16 %v610, %v607
    %v680 = vpack.c.bf16 %v618, %v615
    %v681 = vpack.c.bf16 %v626, %v623
    %v682 = vpack.c.bf16 %v634, %v631
    %v683 = vpack.c.bf16 %v642, %v639
    %v684 = vpack.c.bf16 %v650, %v647
    %v717 = vunpack.c.l.b16 %v653
    %v718 = vunpack.c.h.b16 %v653
    %v719 = vunpack.c.l.b16 %v654
    %v720 = vunpack.c.h.b16 %v654
    %v721 = vunpack.c.l.b16 %v655
    %v722 = vunpack.c.h.b16 %v655
    %v723 = vunpack.c.l.b16 %v656
    %v724 = vunpack.c.h.b16 %v656
    %v725 = vunpack.c.l.b16 %v657
    %v726 = vunpack.c.h.b16 %v657
    %v727 = vunpack.c.l.b16 %v658
    %v728 = vunpack.c.h.b16 %v658
    %v729 = vunpack.c.l.b16 %v659
    %v730 = vunpack.c.h.b16 %v659
    %v731 = vunpack.c.l.b16 %v660
    %v732 = vunpack.c.h.b16 %v660
    %v733 = vunpack.c.l.b16 %v661
    %v734 = vunpack.c.h.b16 %v661
    %v735 = vunpack.c.l.b16 %v662
    %v736 = vunpack.c.h.b16 %v662
    %v737 = vunpack.c.l.b16 %v663
    %v738 = vunpack.c.h.b16 %v663
    %v739 = vunpack.c.l.b16 %v664
    %v740 = vunpack.c.h.b16 %v664
    %v741 = vunpack.c.l.b16 %v665
    %v742 = vunpack.c.h.b16 %v665
    %v743 = vunpack.c.l.b16 %v666
    %v744 = vunpack.c.h.b16 %v666
    %v745 = vunpack.c.l.b16 %v667
    %v746 = vunpack.c.h.b16 %v667
    %v747 = vunpack.c.l.b16 %v668
    %v748 = vunpack.c.h.b16 %v668
    %v749 = vunpack.c.l.b16 %v669
    %v750 = vunpack.c.h.b16 %v669
    %v751 = vunpack.c.l.b16 %v670
    %v752 = vunpack.c.h.b16 %v670
    %v753 = vunpack.c.l.b16 %v671
    %v754 = vunpack.c.h.b16 %v671
    %v755 = vunpack.c.l.b16 %v672
    %v756 = vunpack.c.h.b16 %v672
    %v757 = vunpack.c.l.b16 %v673
    %v758 = vunpack.c.h.b16 %v673
    %v759 = vunpack.c.l.b16 %v674
    %v760 = vunpack.c.h.b16 %v674
    %v761 = vunpack.c.l.b16 %v675
    %v762 = vunpack.c.h.b16 %v675
    %v763 = vunpack.c.l.b16 %v676
    %v764 = vunpack.c.h.b16 %v676
    %v765 = vunpack.c.l.b16 %v677
    %v766 = vunpack.c.h.b16 %v677
    %v767 = vunpack.c.l.b16 %v678
    %v768 = vunpack.c.h.b16 %v678
    %v769 = vunpack.c.l.b16 %v679
    %v770 = vunpack.c.h.b16 %v679
    %v771 = vunpack.c.l.b16 %v680
    %v772 = vunpack.c.h.b16 %v680
    %v773 = vunpack.c.l.b16 %v681
    %v774 = vunpack.c.h.b16 %v681
    %v775 = vunpack.c.l.b16 %v682
    %v776 = vunpack.c.h.b16 %v682
    %v777 = vunpack.c.l.b16 %v683
    %v778 = vunpack.c.h.b16 %v683
    %v779 = vunpack.c.l.b16 %v684
    %v780 = vunpack.c.h.b16 %v684
    %v781 = vpack.c.b16 %v717, %v717
    %v782 = vpack.c.b16 %v718, %v718
    %v783 = vpack.c.b16 %v719, %v719
    %v784 = vpack.c.b16 %v720, %v720
    %v785 = vpack.c.b16 %v721, %v721
    %v786 = vpack.c.b16 %v722, %v722
    %v787 = vpack.c.b16 %v723, %v723
    %v788 = vpack.c.b16 %v724, %v724
    %v789 = vpack.c.b16 %v725, %v725
    %v790 = vpack.c.b16 %v726, %v726
    %v791 = vpack.c.b16 %v727, %v727
    %v792 = vpack.c.b16 %v728, %v728
    %v793 = vpack.c.b16 %v729, %v729
    %v794 = vpack.c.b16 %v730, %v730
    %v795 = vpack.c.b16 %v731, %v731
    %v796 = vpack.c.b16 %v732, %v732
    %v797 = vpack.c.b16 %v733, %v733
    %v798 = vpack.c.b16 %v734, %v734
    %v799 = vpack.c.b16 %v735, %v735
    %v800 = vpack.c.b16 %v736, %v736
    %v801 = vpack.c.b16 %v737, %v737
    %v802 = vpack.c.b16 %v738, %v738
    %v803 = vpack.c.b16 %v739, %v739
    %v804 = vpack.c.b16 %v740, %v740
    %v805 = vpack.c.b16 %v741, %v741
    %v806 = vpack.c.b16 %v742, %v742
    %v807 = vpack.c.b16 %v743, %v743
    %v808 = vpack.c.b16 %v744, %v744
    %v809 = vpack.c.b16 %v745, %v745
    %v810 = vpack.c.b16 %v746, %v746
    %v811 = vpack.c.b16 %v747, %v747
    %v812 = vpack.c.b16 %v748, %v748
    %v813 = vpack.c.b16 %v749, %v749
    %v814 = vpack.c.b16 %v750, %v750
    %v815 = vpack.c.b16 %v751, %v751
    %v816 = vpack.c.b16 %v752, %v752
    %v817 = vpack.c.b16 %v753, %v753
    %v818 = vpack.c.b16 %v754, %v754
    %v819 = vpack.c.b16 %v755, %v755
    %v820 = vpack.c.b16 %v756, %v756
    %v821 = vpack.c.b16 %v757, %v757
    %v822 = vpack.c.b16 %v758, %v758
    %v823 = vpack.c.b16 %v759, %v759
    %v824 = vpack.c.b16 %v760, %v760
    %v825 = vpack.c.b16 %v761, %v761
    %v826 = vpack.c.b16 %v762, %v762
    %v827 = vpack.c.b16 %v763, %v763
    %v828 = vpack.c.b16 %v764, %v764
    %v829 = vpack.c.b16 %v765, %v765
    %v830 = vpack.c.b16 %v766, %v766
    %v831 = vpack.c.b16 %v767, %v767
    %v832 = vpack.c.b16 %v768, %v768
    %v833 = vpack.c.b16 %v769, %v769
    %v834 = vpack.c.b16 %v770, %v770
    %v835 = vpack.c.b16 %v771, %v771
    %v836 = vpack.c.b16 %v772, %v772
    %v837 = vpack.c.b16 %v773, %v773
    %v838 = vpack.c.b16 %v774, %v774
    %v839 = vpack.c.b16 %v775, %v775
    %v840 = vpack.c.b16 %v776, %v776
    %v841 = vpack.c.b16 %v777, %v777
    %v842 = vpack.c.b16 %v778, %v778
    %v843 = vpack.c.b16 %v779, %v779
    %v844 = vpack.c.b16 %v780, %v780
    %909 = vst [vmem:[#allocation7] sm:$0xf] %v781
    %910 = vst [vmem:[#allocation7 + $0x4] sm:$0xf] %v782
    %911 = vst [vmem:[#allocation7 + $0x8] sm:$0xf] %v783
    %912 = vst [vmem:[#allocation7 + $0xc] sm:$0xf] %v784
    %913 = vst [vmem:[#allocation7 + $0x10] sm:$0xf] %v785
    %914 = vst [vmem:[#allocation7 + $0x14] sm:$0xf] %v786
    %915 = vst [vmem:[#allocation7 + $0x18] sm:$0xf] %v787
    %916 = vst [vmem:[#allocation7 + $0x1c] sm:$0xf] %v788
    %917 = vst [vmem:[#allocation7 + $0x20] sm:$0xf] %v789
    %918 = vst [vmem:[#allocation7 + $0x24] sm:$0xf] %v790
    %919 = vst [vmem:[#allocation7 + $0x28] sm:$0xf] %v791
    %920 = vst [vmem:[#allocation7 + $0x2c] sm:$0xf] %v792
    %921 = vst [vmem:[#allocation7 + $0x30] sm:$0xf] %v793
    %922 = vst [vmem:[#allocation7 + $0x34] sm:$0xf] %v794
    %923 = vst [vmem:[#allocation7 + $0x38] sm:$0xf] %v795
    %924 = vst [vmem:[#allocation7 + $0x3c] sm:$0xf] %v796
    %925 = vst [vmem:[#allocation7 + $0x40] sm:$0xf] %v797
    %926 = vst [vmem:[#allocation7 + $0x44] sm:$0xf] %v798
    %927 = vst [vmem:[#allocation7 + $0x48] sm:$0xf] %v799
    %928 = vst [vmem:[#allocation7 + $0x4c] sm:$0xf] %v800
    %929 = vst [vmem:[#allocation7 + $0x50] sm:$0xf] %v801
    %930 = vst [vmem:[#allocation7 + $0x54] sm:$0xf] %v802
    %931 = vst [vmem:[#allocation7 + $0x58] sm:$0xf] %v803
    %932 = vst [vmem:[#allocation7 + $0x5c] sm:$0xf] %v804
    %933 = vst [vmem:[#allocation7 + $0x60] sm:$0xf] %v805
    %934 = vst [vmem:[#allocation7 + $0x64] sm:$0xf] %v806
    %935 = vst [vmem:[#allocation7 + $0x68] sm:$0xf] %v807
    %936 = vst [vmem:[#allocation7 + $0x6c] sm:$0xf] %v808
    %937 = vst [vmem:[#allocation7 + $0x70] sm:$0xf] %v809
    %938 = vst [vmem:[#allocation7 + $0x74] sm:$0xf] %v810
    %939 = vst [vmem:[#allocation7 + $0x78] sm:$0xf] %v811
    %940 = vst [vmem:[#allocation7 + $0x7c] sm:$0xf] %v812
    %941 = vst [vmem:[#allocation7 + $0x80] sm:$0xf] %v813
    %942 = vst [vmem:[#allocation7 + $0x84] sm:$0xf] %v814
    %943 = vst [vmem:[#allocation7 + $0x88] sm:$0xf] %v815
    %944 = vst [vmem:[#allocation7 + $0x8c] sm:$0xf] %v816
    %945 = vst [vmem:[#allocation7 + $0x90] sm:$0xf] %v817
    %946 = vst [vmem:[#allocation7 + $0x94] sm:$0xf] %v818
    %947 = vst [vmem:[#allocation7 + $0x98] sm:$0xf] %v819
    %948 = vst [vmem:[#allocation7 + $0x9c] sm:$0xf] %v820
    %949 = vst [vmem:[#allocation7 + $0xa0] sm:$0xf] %v821
    %950 = vst [vmem:[#allocation7 + $0xa4] sm:$0xf] %v822
    %951 = vst [vmem:[#allocation7 + $0xa8] sm:$0xf] %v823
    %952 = vst [vmem:[#allocation7 + $0xac] sm:$0xf] %v824
    %953 = vst [vmem:[#allocation7 + $0xb0] sm:$0xf] %v825
    %954 = vst [vmem:[#allocation7 + $0xb4] sm:$0xf] %v826
    %955 = vst [vmem:[#allocation7 + $0xb8] sm:$0xf] %v827
    %956 = vst [vmem:[#allocation7 + $0xbc] sm:$0xf] %v828
    %957 = vst [vmem:[#allocation7 + $0xc0] sm:$0xf] %v829
    %958 = vst [vmem:[#allocation7 + $0xc4] sm:$0xf] %v830
    %959 = vst [vmem:[#allocation7 + $0xc8] sm:$0xf] %v831
    %960 = vst [vmem:[#allocation7 + $0xcc] sm:$0xf] %v832
    %961 = vst [vmem:[#allocation7 + $0xd0] sm:$0xf] %v833
    %962 = vst [vmem:[#allocation7 + $0xd4] sm:$0xf] %v834
    %963 = vst [vmem:[#allocation7 + $0xd8] sm:$0xf] %v835
    %964 = vst [vmem:[#allocation7 + $0xdc] sm:$0xf] %v836
    %965 = vst [vmem:[#allocation7 + $0xe0] sm:$0xf] %v837
    %966 = vst [vmem:[#allocation7 + $0xe4] sm:$0xf] %v838
    %967 = vst [vmem:[#allocation7 + $0xe8] sm:$0xf] %v839
    %968 = vst [vmem:[#allocation7 + $0xec] sm:$0xf] %v840
    %969 = vst [vmem:[#allocation7 + $0xf0] sm:$0xf] %v841
    %970 = vst [vmem:[#allocation7 + $0xf4] sm:$0xf] %v842
    %971 = vst [vmem:[#allocation7 + $0xf8] sm:$0xf] %v843
    %972 = vst [vmem:[#allocation7 + $0xfc] sm:$0xf] %v844
    %v973 = vadd.f32 %v399, %v402
    %v974 = vadd.f32 %v973, %v407
    %v975 = vadd.f32 %v974, %v410
    %v976 = vadd.f32 %v975, %v415
    %v977 = vadd.f32 %v976, %v418
    %v978 = vadd.f32 %v977, %v423
    %v979 = vadd.f32 %v978, %v426
    %v980 = vadd.f32 %v979, %v431
    %v981 = vadd.f32 %v980, %v434
    %v982 = vadd.f32 %v981, %v439
    %v983 = vadd.f32 %v982, %v442
    %v984 = vadd.f32 %v983, %v447
    %v985 = vadd.f32 %v984, %v450
    %v986 = vadd.f32 %v985, %v455
    %v987 = vadd.f32 %v986, %v458
    %v988 = vadd.f32 %v987, %v463
    %v989 = vadd.f32 %v988, %v466
    %v990 = vadd.f32 %v989, %v471
    %v991 = vadd.f32 %v990, %v474
    %v992 = vadd.f32 %v991, %v479
    %v993 = vadd.f32 %v992, %v482
    %v994 = vadd.f32 %v993, %v487
    %v995 = vadd.f32 %v994, %v490
    %v996 = vadd.f32 %v995, %v495
    %v997 = vadd.f32 %v996, %v498
    %v998 = vadd.f32 %v997, %v503
    %v999 = vadd.f32 %v998, %v506
    %v1000 = vadd.f32 %v999, %v511
    %v1001 = vadd.f32 %v1000, %v514
    %v1002 = vadd.f32 %v1001, %v519
    %v1003 = vadd.f32 %v1002, %v522
    %v1004 = vadd.f32 %v1003, %v527
    %v1005 = vadd.f32 %v1004, %v530
    %v1006 = vadd.f32 %v1005, %v535
    %v1007 = vadd.f32 %v1006, %v538
    %v1008 = vadd.f32 %v1007, %v543
    %v1009 = vadd.f32 %v1008, %v546
    %v1010 = vadd.f32 %v1009, %v551
    %v1011 = vadd.f32 %v1010, %v554
    %v1012 = vadd.f32 %v1011, %v559
    %v1013 = vadd.f32 %v1012, %v562
    %v1014 = vadd.f32 %v1013, %v567
    %v1015 = vadd.f32 %v1014, %v570
    %v1016 = vadd.f32 %v1015, %v575
    %v1017 = vadd.f32 %v1016, %v578
    %v1018 = vadd.f32 %v1017, %v583
    %v1019 = vadd.f32 %v1018, %v586
    %v1020 = vadd.f32 %v1019, %v591
    %v1021 = vadd.f32 %v1020, %v594
    %v1022 = vadd.f32 %v1021, %v599
    %v1023 = vadd.f32 %v1022, %v602
    %v1024 = vadd.f32 %v1023, %v607
    %v1025 = vadd.f32 %v1024, %v610
    %v1026 = vadd.f32 %v1025, %v615
    %v1027 = vadd.f32 %v1026, %v618
    %v1028 = vadd.f32 %v1027, %v623
    %v1029 = vadd.f32 %v1028, %v626
    %v1030 = vadd.f32 %v1029, %v631
    %v1031 = vadd.f32 %v1030, %v634
    %v1032 = vadd.f32 %v1031, %v639
    %v1033 = vadd.f32 %v1032, %v642
    %v1034 = vadd.f32 %v1033, %v647
    %v1035 = vadd.f32 %v1034, %v650
    %v1036 = vrot.slane %v1035, 4
    %v1037 = vadd.f32 %v1035, %v1036
    %v1038 = vrot.slane %v1037, 2
    %v1039 = vadd.f32 %v1037, %v1038
    %v1040 = vrot.slane %v1039, 1
    %v1041 = vadd.f32 %v1039, %v1040
    %v1042 = vmul.f32 %v399, %v399
    %v1043 = vmul.f32 %v402, %v402
    %v1044 = vmul.f32 %v407, %v407
    %v1045 = vmul.f32 %v410, %v410
    %v1046 = vmul.f32 %v415, %v415
    %v1047 = vmul.f32 %v418, %v418
    %v1048 = vmul.f32 %v423, %v423
    %v1049 = vmul.f32 %v426, %v426
    %v1050 = vmul.f32 %v431, %v431
    %v1051 = vmul.f32 %v434, %v434
    %v1052 = vmul.f32 %v439, %v439
    %v1053 = vmul.f32 %v442, %v442
    %v1054 = vmul.f32 %v447, %v447
    %v1055 = vmul.f32 %v450, %v450
    %v1056 = vmul.f32 %v455, %v455
    %v1057 = vmul.f32 %v458, %v458
    %v1058 = vmul.f32 %v463, %v463
    %v1059 = vmul.f32 %v466, %v466
    %v1060 = vmul.f32 %v471, %v471
    %v1061 = vmul.f32 %v474, %v474
    %v1062 = vmul.f32 %v479, %v479
    %v1063 = vmul.f32 %v482, %v482
    %v1064 = vmul.f32 %v487, %v487
    %v1065 = vmul.f32 %v490, %v490
    %v1066 = vmul.f32 %v495, %v495
    %v1067 = vmul.f32 %v498, %v498
    %v1068 = vmul.f32 %v503, %v503
    %v1069 = vmul.f32 %v506, %v506
    %v1070 = vmul.f32 %v511, %v511
    %v1071 = vmul.f32 %v514, %v514
    %v1072 = vmul.f32 %v519, %v519
    %v1073 = vmul.f32 %v522, %v522
    %v1074 = vmul.f32 %v527, %v527
    %v1075 = vmul.f32 %v530, %v530
    %v1076 = vmul.f32 %v535, %v535
    %v1077 = vmul.f32 %v538, %v538
    %v1078 = vmul.f32 %v543, %v543
    %v1079 = vmul.f32 %v546, %v546
    %v1080 = vmul.f32 %v551, %v551
    %v1081 = vmul.f32 %v554, %v554
    %v1082 = vmul.f32 %v559, %v559
    %v1083 = vmul.f32 %v562, %v562
    %v1084 = vmul.f32 %v567, %v567
    %v1085 = vmul.f32 %v570, %v570
    %v1086 = vmul.f32 %v575, %v575
    %v1087 = vmul.f32 %v578, %v578
    %v1088 = vmul.f32 %v583, %v583
    %v1089 = vmul.f32 %v586, %v586
    %v1090 = vmul.f32 %v591, %v591
    %v1091 = vmul.f32 %v594, %v594
    %v1092 = vmul.f32 %v599, %v599
    %v1093 = vmul.f32 %v602, %v602
    %v1094 = vmul.f32 %v607, %v607
    %v1095 = vmul.f32 %v610, %v610
    %v1096 = vmul.f32 %v615, %v615
    %v1097 = vmul.f32 %v618, %v618
    %v1098 = vmul.f32 %v623, %v623
    %v1099 = vmul.f32 %v626, %v626
    %v1100 = vmul.f32 %v631, %v631
    %v1101 = vmul.f32 %v634, %v634
    %v1102 = vmul.f32 %v639, %v639
    %v1103 = vmul.f32 %v642, %v642
    %v1104 = vmul.f32 %v647, %v647
    %v1105 = vmul.f32 %v650, %v650
    %v1106 = vadd.f32 %v1042, %v1043
    %v1107 = vadd.f32 %v1106, %v1044
    %v1108 = vadd.f32 %v1107, %v1045
    %v1109 = vadd.f32 %v1108, %v1046
    %v1110 = vadd.f32 %v1109, %v1047
    %v1111 = vadd.f32 %v1110, %v1048
    %v1112 = vadd.f32 %v1111, %v1049
    %v1113 = vadd.f32 %v1112, %v1050
    %v1114 = vadd.f32 %v1113, %v1051
    %v1115 = vadd.f32 %v1114, %v1052
    %v1116 = vadd.f32 %v1115, %v1053
    %v1117 = vadd.f32 %v1116, %v1054
    %v1118 = vadd.f32 %v1117, %v1055
    %v1119 = vadd.f32 %v1118, %v1056
    %v1120 = vadd.f32 %v1119, %v1057
    %v1121 = vadd.f32 %v1120, %v1058
    %v1122 = vadd.f32 %v1121, %v1059
    %v1123 = vadd.f32 %v1122, %v1060
    %v1124 = vadd.f32 %v1123, %v1061
    %v1125 = vadd.f32 %v1124, %v1062
    %v1126 = vadd.f32 %v1125, %v1063
    %v1127 = vadd.f32 %v1126, %v1064
    %v1128 = vadd.f32 %v1127, %v1065
    %v1129 = vadd.f32 %v1128, %v1066
    %v1130 = vadd.f32 %v1129, %v1067
    %v1131 = vadd.f32 %v1130, %v1068
    %v1132 = vadd.f32 %v1131, %v1069
    %v1133 = vadd.f32 %v1132, %v1070
    %v1134 = vadd.f32 %v1133, %v1071
    %v1135 = vadd.f32 %v1134, %v1072
    %v1136 = vadd.f32 %v1135, %v1073
    %v1137 = vadd.f32 %v1136, %v1074
    %v1138 = vadd.f32 %v1137, %v1075
    %v1139 = vadd.f32 %v1138, %v1076
    %v1140 = vadd.f32 %v1139, %v1077
    %v1141 = vadd.f32 %v1140, %v1078
    %v1142 = vadd.f32 %v1141, %v1079
    %v1143 = vadd.f32 %v1142, %v1080
    %v1144 = vadd.f32 %v1143, %v1081
    %v1145 = vadd.f32 %v1144, %v1082
    %v1146 = vadd.f32 %v1145, %v1083
    %v1147 = vadd.f32 %v1146, %v1084
    %v1148 = vadd.f32 %v1147, %v1085
    %v1149 = vadd.f32 %v1148, %v1086
    %v1150 = vadd.f32 %v1149, %v1087
    %v1151 = vadd.f32 %v1150, %v1088
    %v1152 = vadd.f32 %v1151, %v1089
    %v1153 = vadd.f32 %v1152, %v1090
    %v1154 = vadd.f32 %v1153, %v1091
    %v1155 = vadd.f32 %v1154, %v1092
    %v1156 = vadd.f32 %v1155, %v1093
    %v1157 = vadd.f32 %v1156, %v1094
    %v1158 = vadd.f32 %v1157, %v1095
    %v1159 = vadd.f32 %v1158, %v1096
    %v1160 = vadd.f32 %v1159, %v1097
    %v1161 = vadd.f32 %v1160, %v1098
    %v1162 = vadd.f32 %v1161, %v1099
    %v1163 = vadd.f32 %v1162, %v1100
    %v1164 = vadd.f32 %v1163, %v1101
    %v1165 = vadd.f32 %v1164, %v1102
    %v1166 = vadd.f32 %v1165, %v1103
    %v1167 = vadd.f32 %v1166, %v1104
    %v1168 = vadd.f32 %v1167, %v1105
    %v1169 = vrot.slane %v1168, 4
    %v1170 = vadd.f32 %v1168, %v1169
    %v1171 = vrot.slane %v1170, 2
    %v1172 = vadd.f32 %v1170, %v1171
    %v1173 = vrot.slane %v1172, 1
    %v1174 = vadd.f32 %v1172, %v1173
    %vm1175 = vcmask 1040384
    %v1176 = vsel %vm1175, %v1041, %v1174
    %1177 = vst [vmem:[#allocation8] sm:$0x3] %v1176
    // Predicated region
    $region18: #{tpu_custom_call.1} parent=1 // pred_check
      _
    $region19: #{tpu_custom_call.1} parent=1 // pred_check_branch
      %1179 = sbr.rel (0) target = $region21
    $region20: #{tpu_custom_call.1} parent=1 // pred_region
      %s1181 = ssub.s32 4096, 4096
      %1182 = vsyncadd [#allocation4], %s1181
      %s1183 = sshll.u32 [#allocation7], 4
      %s1184 = int_to_ptr.vmem [resolvable:$true] %s1183
      %1189 = dma.vmem_to_hbm [thread:$0]  %s1184, 4096, %s2, [#allocation4], 64, 64, 4
    $region21: #{tpu_custom_call.1} parent=1 // pred_fallthru
      _
    // Predicated region
    $region22: #{tpu_custom_call.1} parent=1 // pred_check
      _
    $region23: #{tpu_custom_call.1} parent=1 // pred_check_branch
      %1191 = sbr.rel (0) target = $region25
    $region24: #{tpu_custom_call.1} parent=1 // pred_region
      %s1193 = ssub.s32 32, 32
      %1194 = vsyncadd [#allocation9], %s1193
      %s1196 = sshll.u32 [#allocation8], 4
      %s1197 = int_to_ptr.vmem [resolvable:$true] %s1196
      %1199 = dma.vmem_to_hbm [thread:$0]  %s1197, 32, %s3, [#allocation9]
    $region25: #{tpu_custom_call.1} parent=1 // pred_fallthru
      _
    // Predicated region
    $region26: #{tpu_custom_call.1} parent=1 // pred_check
      _
    $region27: #{tpu_custom_call.1} parent=1 // pred_check_branch
      %1201 = sbr.rel (0) target = $region29
    $region28: #{tpu_custom_call.1} parent=1 // pred_region
      %1202 = dma.done [#allocation4], 4096
    $region29: #{tpu_custom_call.1} parent=1 // pred_fallthru
      _
    // Predicated region
    $region30: #{tpu_custom_call.1} parent=1 // pred_check
      _
    $region31: #{tpu_custom_call.1} parent=1 // pred_check_branch
      %1204 = sbr.rel (0) target = $region33
    $region32: #{tpu_custom_call.1} parent=1 // pred_region
      %1205 = dma.done [#allocation9], 32
    $region33: #{tpu_custom_call.1} parent=1 // pred_fallthru
      _
    %1206 = vsyncpa [#allocation3], 1
    %1207 = vsyncpa [#allocation6], 1
    %1208 = vsyncpa [#allocation4], 1
    %1209 = vsyncpa [#allocation9], 1

</llo_original>
